<compile_context>
chip_gen: v7x
topology: tpu7x:2x2x1
jax: 0.10.0
libtpu: 0.0.40
codegen_flags: <defaults>
</compile_context>

<pallas_src>
from functools import partial

import jax
import jax.numpy as jnp
from jax import lax
from jax.experimental import pallas as pl
from jax.experimental.pallas import tpu as pltpu

KSIZE = 17
PAD = 8


def _round_up(x, m):
    return (x + m - 1) // m * m


def _num_tensorcores():
    """Best-effort TensorCore count (v7x: 2, v5e/v6e: 1). Never raises."""
    try:
        info = pltpu.get_tpu_info()
        for name in ("num_cores", "num_tensorcores", "tensorcores_per_chip",
                     "cores_per_chip"):
            v = getattr(info, name, None)
            if isinstance(v, int) and v > 0:
                return v
    except Exception:
        pass
    try:
        d = jax.devices()[0]
        for name in ("num_cores", "core_count"):
            v = getattr(d, name, None)
            if isinstance(v, int) and v > 0:
                return v
    except Exception:
        pass
    return 2  # conservative default: assume 2 TCs (v7x-safe)


def _pick_batch_block(n, length, c_in, c_in_p, c_tot, c_out_p, num_tc,
                      vmem_budget=24 * 1024 * 1024):
    """# of batch elements folded into the lane axis of one grid step."""
    seg = length + 2 * PAD
    best, best_key = 1, None
    for b in range(1, n + 1):
        if n % b:
            continue
        width = _round_up(b * seg, 128)
        # VMEM estimate: in + out blocks double-buffered, bf16 patch/act, y.
        need = (2 * c_in * width * 4 + 2 * c_tot * width * 4
                + (KSIZE + 2) * c_in_p * width * 2 + c_out_p * width * 4)
        if need > vmem_budget:
            continue
        g = n // b
        lanes = b * seg
        if num_tc > 1:
            # Keep every TensorCore fed and balanced before growing the block.
            key = (int(g >= num_tc), int(g % num_tc == 0), min(lanes, 512), -g)
        else:
            # Single TC: fewest, biggest steps (per-step overhead ~0.35us).
            key = (1, 1, lanes, -g)
        if best_key is None or key > best_key:
            best, best_key = b, key
    return best


def _basic_block_kernel(x_ref, mask_ref, scale_ref, shift_ref, w_ref, out_ref,
                        *, c_in, c_in_p, c_out, apply_mask):
    # x_ref:     (1, C_in, W)        raw x (direct mode) or zero-separated
    #                                per-batch segments (fold mode), f32
    # mask_ref:  (1, W)              1.0 on data columns (fold mode only)
    # scale_ref: (C_in, 1)           gamma / sqrt(var + eps)
    # shift_ref: (C_in, 1)           beta - mean * scale
    # w_ref:     (C_out_p, K*C_in_p) im2col-flattened conv weight (bf16)
    # out_ref:   (1, C_in+C_out, W)
    width = x_ref.shape[2]

    xp = x_ref[0]                                            # (C_in, W) f32

    # BatchNorm (inference affine) + ReLU on the VPU (f32 math; v5e has no
    # bf16 VPU path).  In fold mode, re-zero the inter-segment pad columns so
    # the conv sees zero padding applied *after* the activation.
    act = jnp.maximum(xp * scale_ref[...] + shift_ref[...], 0.0)
    if apply_mask:
        act = act * mask_ref[...]

    # Cast to bf16 BEFORE im2col: halves vreg traffic of the 17 shifted views.
    act_bf = act.astype(w_ref.dtype)
    if c_in_p > c_in:  # sublane-align the per-tap im2col segment
        act_bf = jnp.concatenate(
            [act_bf, jnp.zeros((c_in_p - c_in, width), w_ref.dtype)], axis=0)

    # Conv halo: 8 zero columns on each side, created in-register (never
    # materialized in HBM; this is the conv's zero padding in direct mode).
    zhalo = jnp.zeros((c_in_p, PAD), w_ref.dtype)
    act_ext = jnp.concatenate([zhalo, act_bf, zhalo], axis=1)  # (C_in_p, W+16)

    # im2col: 17 tap-shifted views stacked along the contraction axis.
    patch = jnp.concatenate(
        [act_ext[:, k:k + width] for k in range(KSIZE)], axis=0)  # (K*C_in_p, W)

    # Single MXU matmul: bf16 operands, f32 accumulation.
    y = jnp.dot(w_ref[...], patch,
                preferred_element_type=jnp.float32)          # (C_out_p, W)

    # [x, conv] along channels.  Two sublane-aligned stores when C_in % 8 == 0
    # (no extra full-block copy); otherwise one fused store (known-good path).
    if c_in % 8 == 0:
        out_ref[0, :c_in, :] = xp.astype(out_ref.dtype)
        out_ref[0, c_in:, :] = y[:c_out].astype(out_ref.dtype)
    else:
        out_ref[0, :, :] = jnp.concatenate(
            [xp, y[:c_out]], axis=0).astype(out_ref.dtype)


def basic_block_forward(x, gamma, beta, running_mean, running_var, weight,
                        eps=1e-5, matmul_dtype=jnp.bfloat16):
    """x: (N, C_in, L) f32.  weight: (C_out, C_in, 17).  Returns (N, C_in+C_out, L)."""
    n, c_in, length = x.shape
    c_out = weight.shape[0]
    c_tot = c_in + c_out
    seg = length + 2 * PAD

    c_in_p = _round_up(c_in, 16 if c_in >= 16 else 8)  # align bf16 im2col segments
    c_out_p = _round_up(c_out, 8)

    num_tc = _num_tensorcores()
    # Fold batches into the lane axis only when L is narrow; for L >= 128 the
    # lane axis is already wide and folding would only add HBM transposes.
    b = 1 if length >= 128 else _pick_batch_block(
        n, length, c_in, c_in_p, c_tot, c_out_p, num_tc)
    g = n // b
    fold = b > 1

    # Fold BN running stats into per-channel scale/shift column vectors (f32).
    scale = (gamma / jnp.sqrt(running_var + eps)).astype(jnp.float32)
    shift = (beta - running_mean * scale).astype(jnp.float32)
    scale = scale.reshape(c_in, 1)
    shift = shift.reshape(c_in, 1)

    # im2col weight, zero-padded in both channel dims:
    #   w2[o, k*C_in_p + i] = weight[o, i, k]  for i < C_in, o < C_out, else 0.
    wt = jnp.transpose(weight, (0, 2, 1)).astype(jnp.float32)       # (C_out, K, C_in)
    wt = jnp.pad(wt, ((0, c_out_p - c_out), (0, 0), (0, c_in_p - c_in)))
    w2 = wt.reshape(c_out_p, KSIZE * c_in_p).astype(matmul_dtype)

    xf = x.astype(jnp.float32)
    if fold:
        # Fold b batch elems into the lane axis as zero-separated segments and
        # round the block width up to a multiple of 128 (lane-dense stores).
        width = _round_up(b * seg, 128)
        xg = xf.reshape(g, b, c_in, length).transpose(0, 2, 1, 3)   # (G, C_in, B, L)
        xg = jnp.pad(xg, ((0, 0), (0, 0), (0, 0), (PAD, PAD)))      # (G, C_in, B, seg)
        xg = xg.reshape(g, c_in, b * seg)
        xg = jnp.pad(xg, ((0, 0), (0, 0), (0, width - b * seg)))    # (G, C_in, W)
        seg_mask = jnp.zeros((seg,), jnp.float32).at[PAD:PAD + length].set(1.0)
        mask = jnp.pad(jnp.tile(seg_mask, b), (0, width - b * seg))[None, :]
    else:
        # Direct mode: zero wrapper-side pad/slice/transpose passes; the conv
        # halo is created in-register inside the kernel.
        width = length
        xg = xf                                                     # (N, C_in, L)
        mask = jnp.ones((1, width), jnp.float32)                    # unused

    kernel = partial(_basic_block_kernel, c_in=c_in, c_in_p=c_in_p,
                     c_out=c_out, apply_mask=fold)

    grid_spec = pltpu.PrefetchScalarGridSpec(
        num_scalar_prefetch=0,
        grid=(g,),
        in_specs=[
            pl.BlockSpec((1, c_in, width), lambda i: (i, 0, 0)),
            pl.BlockSpec((1, width), lambda i: (0, 0)),
            pl.BlockSpec((c_in, 1), lambda i: (0, 0)),
            pl.BlockSpec((c_in, 1), lambda i: (0, 0)),
            pl.BlockSpec((c_out_p, KSIZE * c_in_p), lambda i: (0, 0)),
        ],
        out_specs=pl.BlockSpec((1, c_tot, width), lambda i: (i, 0, 0)),
    )

    out = pl.pallas_call(
        kernel,
        out_shape=jax.ShapeDtypeStruct((g, c_tot, width), jnp.float32),
        grid_spec=grid_spec,
        compiler_params=pltpu.CompilerParams(
            dimension_semantics=("parallel",),
            vmem_limit_bytes=64 * 1024 * 1024),   # above every gen's scoped default
    )(xg, mask, scale, shift, w2)

    if not fold:
        return out                                                  # (N, C_tot, L)

    # Unfold: drop the per-segment halo / junk columns, restore (N, C_tot, L).
    valid = out[:, :, :b * seg].reshape(g, c_tot, b, seg)[..., PAD:PAD + length]
    return valid.transpose(0, 2, 1, 3).reshape(n, c_tot, length)


def _reference(x, gamma, beta, running_mean, running_var, weight, eps=1e-5,
               conv_dtype=jnp.float32):
    # Pure-JAX reference (eval-mode BN semantics); conv_dtype lets us match
    # the kernel's bf16-operand / f32-accumulate matmul precision.
    scale = gamma / jnp.sqrt(running_var + eps)
    shift = beta - running_mean * scale
    act = jnp.maximum(x * scale[None, :, None] + shift[None, :, None], 0.0)
    out = lax.conv_general_dilated(
        act.astype(conv_dtype), weight.astype(conv_dtype),
        window_strides=(1,), padding=[(PAD, PAD)],
        dimension_numbers=("NCH", "OIH", "NCH"),
        preferred_element_type=jnp.float32)
    return jnp.concatenate([x, out.astype(x.dtype)], axis=1)


def _run_case(key, n, c_in, c_out, length):
    kx, kw, kg, kb, km, kv = jax.random.split(key, 6)
    x = jax.random.normal(kx, (n, c_in, length), dtype=jnp.float32)
    weight = jax.random.normal(kw, (c_out, c_in, KSIZE), dtype=jnp.float32) * 0.1
    gamma = 1.0 + 0.1 * jax.random.normal(kg, (c_in,), dtype=jnp.float32)
    beta = 0.1 * jax.random.normal(kb, (c_in,), dtype=jnp.float32)
    running_mean = 0.1 * jax.random.normal(km, (c_in,), dtype=jnp.float32)
    running_var = 1.0 + 0.1 * jax.random.uniform(kv, (c_in,), dtype=jnp.float32)

    out = basic_block_forward(x, gamma, beta, running_mean, running_var, weight)
    out = jax.block_until_ready(out)
    assert out.shape == (n, c_in + c_out, length)

    # Tight check vs a reference using the same bf16-operand / f32-accumulate
    # matmul precision; loose check vs the pure-f32 PyTorch-equivalent math.
    ref_bf = _reference(x, gamma, beta, running_mean, running_var, weight,
                        conv_dtype=jnp.bfloat16)
    ref_f32 = _reference(x, gamma, beta, running_mean, running_var, weight)
    assert jnp.allclose(out, ref_bf, atol=2e-3, rtol=2e-3), "mismatch vs bf16 reference"
    assert jnp.allclose(out, ref_f32, atol=6e-2, rtol=6e-2), "mismatch vs f32 reference"


if __name__ == "__main__":
    key = jax.random.PRNGKey(0)
    k1, k2, k3 = jax.random.split(key, 3)
    # Narrow case: heuristic keeps enough grid steps for 2 TCs (or folds on
    # single-TC chips); exercises the sub-8-channel fused-store fallback.
    _run_case(k1, n=2, c_in=4, c_out=8, length=32)
    # Fold-mode case on 2-TC chips: 2 batches/step -> 256-lane lane-dense blocks.
    _run_case(k2, n=4, c_in=6, c_out=10, length=64)
    # Direct mode (L >= 128): raw x in / (N,C_tot,L) out, zero wrapper passes,
    # aligned split stores (c_in % 8 == 0), 128-lane dense stores.
    _run_case(k3, n=2, c_in=8, c_out=8, length=128)

    # dropRate == 0.0 so dropout is a no-op.
    # TODO(synk): add pltpu PRNG-based dropout if dropRate > 0 is ever needed.
    print("KERNEL_OK")
</pallas_src>

<mosaic_0001>
module attributes {stable_mosaic.version = 11 : i64} {
  func.func @_basic_block_kernel(%arg0: i32, %arg1: memref<1x4x32xf32, #tpu.memory_space<vmem>>, %arg2: memref<1x32xf32, #tpu.memory_space<vmem>>, %arg3: memref<4x1xf32, #tpu.memory_space<vmem>>, %arg4: memref<4x1xf32, #tpu.memory_space<vmem>>, %arg5: memref<8x136xbf16, #tpu.memory_space<vmem>>, %arg6: memref<1x12x32xf32, #tpu.memory_space<vmem>>) attributes {dimension_semantics = [#tpu.dimension_semantics<parallel>], iteration_bounds = array<i64: 2>, scalar_prefetch = 0 : i64, scratch_operands = 0 : i64, tpu.core_type = #tpu.core_type<tc>, window_params = [{transform_indices = @transform_0, window_bounds = array<i64: 1, 4, 32>}, {pipeline_mode = #tpu.pipeline_mode<synchronous>, transform_indices = @transform_1, window_bounds = array<i64: 1, 32>}, {pipeline_mode = #tpu.pipeline_mode<synchronous>, transform_indices = @transform_2, window_bounds = array<i64: 4, 1>}, {pipeline_mode = #tpu.pipeline_mode<synchronous>, transform_indices = @transform_3, window_bounds = array<i64: 4, 1>}, {pipeline_mode = #tpu.pipeline_mode<synchronous>, transform_indices = @transform_4, window_bounds = array<i64: 8, 136>}, {transform_indices = @transform_5, window_bounds = array<i64: 1, 12, 32>}]} {
    %c0 = arith.constant 0 : index
    %c0_0 = arith.constant 0 : index
    %c0_1 = arith.constant 0 : index
    %0 = vector.load %arg1[%c0, %c0_0, %c0_1] : memref<1x4x32xf32, #tpu.memory_space<vmem>>, vector<1x4x32xf32>
    %1 = vector.shape_cast %0 : vector<1x4x32xf32> to vector<4x32xf32>
    %c0_2 = arith.constant 0 : index
    %c0_3 = arith.constant 0 : index
    %2 = vector.load %arg3[%c0_2, %c0_3] : memref<4x1xf32, #tpu.memory_space<vmem>>, vector<4x1xf32>
    %3 = vector.broadcast %2 : vector<4x1xf32> to vector<4x32xf32>
    %4 = arith.mulf %1, %3 : vector<4x32xf32>
    %c0_4 = arith.constant 0 : index
    %c0_5 = arith.constant 0 : index
    %5 = vector.load %arg4[%c0_4, %c0_5] : memref<4x1xf32, #tpu.memory_space<vmem>>, vector<4x1xf32>
    %6 = vector.broadcast %5 : vector<4x1xf32> to vector<4x32xf32>
    %7 = arith.addf %4, %6 : vector<4x32xf32>
    %cst = arith.constant 0.000000e+00 : f32
    %8 = vector.broadcast %cst : f32 to vector<4x32xf32>
    %9 = arith.maximumf %7, %8 : vector<4x32xf32>
    %10 = arith.truncf %9 : vector<4x32xf32> to vector<4x32xbf16>
    %cst_6 = arith.constant 0.000000e+00 : bf16
    %11 = vector.broadcast %cst_6 : bf16 to vector<4x32xbf16>
    %12 = tpu.concatenate %10, %11 in 0 : vector<4x32xbf16>, vector<4x32xbf16> -> vector<8x32xbf16>
    %cst_7 = arith.constant 0.000000e+00 : bf16
    %13 = vector.broadcast %cst_7 : bf16 to vector<8x8xbf16>
    %14 = tpu.concatenate %13, %12, %13 in 1 : vector<8x8xbf16>, vector<8x32xbf16>, vector<8x8xbf16> -> vector<8x48xbf16>
    %15 = vector.extract_strided_slice %14 {offsets = [0, 0], sizes = [8, 32], strides = [1, 1]} : vector<8x48xbf16> to vector<8x32xbf16>
    %16 = vector.extract_strided_slice %14 {offsets = [0, 1], sizes = [8, 32], strides = [1, 1]} : vector<8x48xbf16> to vector<8x32xbf16>
    %17 = vector.extract_strided_slice %14 {offsets = [0, 2], sizes = [8, 32], strides = [1, 1]} : vector<8x48xbf16> to vector<8x32xbf16>
    %18 = vector.extract_strided_slice %14 {offsets = [0, 3], sizes = [8, 32], strides = [1, 1]} : vector<8x48xbf16> to vector<8x32xbf16>
    %19 = vector.extract_strided_slice %14 {offsets = [0, 4], sizes = [8, 32], strides = [1, 1]} : vector<8x48xbf16> to vector<8x32xbf16>
    %20 = vector.extract_strided_slice %14 {offsets = [0, 5], sizes = [8, 32], strides = [1, 1]} : vector<8x48xbf16> to vector<8x32xbf16>
    %21 = vector.extract_strided_slice %14 {offsets = [0, 6], sizes = [8, 32], strides = [1, 1]} : vector<8x48xbf16> to vector<8x32xbf16>
    %22 = vector.extract_strided_slice %14 {offsets = [0, 7], sizes = [8, 32], strides = [1, 1]} : vector<8x48xbf16> to vector<8x32xbf16>
    %23 = vector.extract_strided_slice %14 {offsets = [0, 8], sizes = [8, 32], strides = [1, 1]} : vector<8x48xbf16> to vector<8x32xbf16>
    %24 = vector.extract_strided_slice %14 {offsets = [0, 9], sizes = [8, 32], strides = [1, 1]} : vector<8x48xbf16> to vector<8x32xbf16>
    %25 = vector.extract_strided_slice %14 {offsets = [0, 10], sizes = [8, 32], strides = [1, 1]} : vector<8x48xbf16> to vector<8x32xbf16>
    %26 = vector.extract_strided_slice %14 {offsets = [0, 11], sizes = [8, 32], strides = [1, 1]} : vector<8x48xbf16> to vector<8x32xbf16>
    %27 = vector.extract_strided_slice %14 {offsets = [0, 12], sizes = [8, 32], strides = [1, 1]} : vector<8x48xbf16> to vector<8x32xbf16>
    %28 = vector.extract_strided_slice %14 {offsets = [0, 13], sizes = [8, 32], strides = [1, 1]} : vector<8x48xbf16> to vector<8x32xbf16>
    %29 = vector.extract_strided_slice %14 {offsets = [0, 14], sizes = [8, 32], strides = [1, 1]} : vector<8x48xbf16> to vector<8x32xbf16>
    %30 = vector.extract_strided_slice %14 {offsets = [0, 15], sizes = [8, 32], strides = [1, 1]} : vector<8x48xbf16> to vector<8x32xbf16>
    %31 = vector.extract_strided_slice %14 {offsets = [0, 16], sizes = [8, 32], strides = [1, 1]} : vector<8x48xbf16> to vector<8x32xbf16>
    %32 = tpu.concatenate %15, %16, %17, %18, %19, %20, %21, %22, %23, %24, %25, %26, %27, %28, %29, %30 in 0 : vector<8x32xbf16>, vector<8x32xbf16>, vector<8x32xbf16>, vector<8x32xbf16>, vector<8x32xbf16>, vector<8x32xbf16>, vector<8x32xbf16>, vector<8x32xbf16>, vector<8x32xbf16>, vector<8x32xbf16>, vector<8x32xbf16>, vector<8x32xbf16>, vector<8x32xbf16>, vector<8x32xbf16>, vector<8x32xbf16>, vector<8x32xbf16> -> vector<128x32xbf16>
    %33 = tpu.concatenate %32, %31 in 0 : vector<128x32xbf16>, vector<8x32xbf16> -> vector<136x32xbf16>
    %c0_8 = arith.constant 0 : index
    %c0_9 = arith.constant 0 : index
    %34 = vector.load %arg5[%c0_8, %c0_9] : memref<8x136xbf16, #tpu.memory_space<vmem>>, vector<8x136xbf16>
    %cst_10 = arith.constant dense<0.000000e+00> : vector<8x32xf32>
    %35 = tpu.matmul %34, %33, %cst_10 {dimension_numbers = #tpu.dot_dimension_numbers<[1], [0], [0], [1], [0, 0, 1, 1], [], []>} : vector<8x136xbf16>, vector<136x32xbf16>, vector<8x32xf32> -> vector<8x32xf32>
    %36 = tpu.concatenate %1, %35 in 0 : vector<4x32xf32>, vector<8x32xf32> -> vector<12x32xf32>
    %c0_11 = arith.constant 0 : index
    %c0_12 = arith.constant 0 : index
    %c0_13 = arith.constant 0 : index
    %37 = vector.load %arg6[%c0_11, %c0_12, %c0_13] : memref<1x12x32xf32, #tpu.memory_space<vmem>>, vector<1x12x32xf32>
    %38 = vector.shape_cast %37 : vector<1x12x32xf32> to vector<12x32xf32>
    %39 = vector.shape_cast %36 : vector<12x32xf32> to vector<1x12x32xf32>
    tpu.vector_store %arg6[%c0_11, %c0_12, %c0_13], %39 {strides = array<i32>} : memref<1x12x32xf32, #tpu.memory_space<vmem>>, vector<1x12x32xf32>,
    return
  }
  func.func @transform_0(%arg0: i32) -> (i32, i32, i32) {
    %c0_i32 = arith.constant 0 : i32
    %c0_i32_0 = arith.constant 0 : i32
    %c0_i32_1 = arith.constant 0 : i32
    return %arg0, %c0_i32, %c0_i32_0 : i32, i32, i32
  }
  func.func @transform_1(%arg0: i32) -> (i32, i32) {
    %c0_i32 = arith.constant 0 : i32
    %c0_i32_0 = arith.constant 0 : i32
    %c0_i32_1 = arith.constant 0 : i32
    return %c0_i32, %c0_i32_0 : i32, i32
  }
  func.func @transform_2(%arg0: i32) -> (i32, i32) {
    %c0_i32 = arith.constant 0 : i32
    %c0_i32_0 = arith.constant 0 : i32
    %c0_i32_1 = arith.constant 0 : i32
    return %c0_i32, %c0_i32_0 : i32, i32
  }
  func.func @transform_3(%arg0: i32) -> (i32, i32) {
    %c0_i32 = arith.constant 0 : i32
    %c0_i32_0 = arith.constant 0 : i32
    %c0_i32_1 = arith.constant 0 : i32
    return %c0_i32, %c0_i32_0 : i32, i32
  }
  func.func @transform_4(%arg0: i32) -> (i32, i32) {
    %c0_i32 = arith.constant 0 : i32
    %c0_i32_0 = arith.constant 0 : i32
    %c0_i32_1 = arith.constant 0 : i32
    return %c0_i32, %c0_i32_0 : i32, i32
  }
  func.func @transform_5(%arg0: i32) -> (i32, i32, i32) {
    %c0_i32 = arith.constant 0 : i32
    %c0_i32_0 = arith.constant 0 : i32
    %c0_i32_1 = arith.constant 0 : i32
    return %arg0, %c0_i32, %c0_i32_0 : i32, i32, i32
  }
}

</mosaic_0001>

<llo_original>
// kernel: tpu_custom_call.1
$region0: #{tpu_custom_call.1}
  #allocation0 [shape = 'u32[]', space=smem, size = 0x4, offset = 0x4, fixed_abs, tag = 'smem constant byte address 0x4 - core index']
  #allocation1 [shape = 'u32[144,128]{1,0:T(1,128)}', space=vmem, size = 0x12000, scoped, tag = 'internal scratch']
  %s0 = inlined_call_operand.hbm [shape: f32[2,4,32], index: 0, kind: input, shape index: {}]
  %s1 = inlined_call_operand.hbm [shape: f32[1,32], index: 1, kind: input, shape index: {}]
  %s2 = inlined_call_operand.hbm [shape: f32[4,1], index: 2, kind: input, shape index: {}]
  %s3 = inlined_call_operand.hbm [shape: f32[4,1], index: 3, kind: input, shape index: {}]
  %s4 = inlined_call_operand.hbm [shape: bf16[8,136], index: 4, kind: input, shape index: {}]
  %s5 = inlined_call_operand.hbm [shape: f32[2,12,32], index: 5, kind: output, shape index: {}]
  %s6 = sld [smem:[#allocation0]]
  $region73: #{tpu_custom_call.1} parent=0
    _
  %s8 = ssub.s32 1, %s6
  %s9 = scalar_select 0, %s8, %s6
  $region1: #{tpu_custom_call.1} parent=0
    #allocation2 [shape = 'u8[4096]{0}', space=vmem, size = 0x1000, scoped, tag = 'input window, operand 0']
    #allocation3 [shape = 's32[2]{0}', space=sflag, size = 0x8, scoped, tag = 'scoped memory for tpu_custom_call.1']
    #allocation4 [shape = 's32[2]{0}', space=sflag, size = 0x8, scoped, tag = 'scoped memory for tpu_custom_call.1']
    #allocation5 [shape = 'u8[512]{0}', space=vmem, size = 0x400, scoped, tag = 'input window, operand 1, single buffered']
    #allocation6 [shape = 's32[1]{0}', space=sflag, size = 0x4, scoped, tag = 'scoped memory for tpu_custom_call.1']
    #allocation7 [shape = 'u8[2048]{0}', space=vmem, size = 0x800, scoped, tag = 'input window, operand 2, single buffered']
    #allocation8 [shape = 'u8[2048]{0}', space=vmem, size = 0x800, scoped, tag = 'input window, operand 3, single buffered']
    #allocation9 [shape = 's32[1]{0}', space=sflag, size = 0x4, scoped, tag = 'scoped memory for tpu_custom_call.1']
    #allocation10 [shape = 'u8[4096]{0}', space=vmem, size = 0x1000, scoped, tag = 'input window, operand 4, single buffered']
    #allocation11 [shape = 'u8[16384]{0}', space=vmem, size = 0x4000, scoped, tag = 'output window, operand 0']
    %10 = vsyncpa [#allocation3], 0
    %s11 = scalar_lea.sflag [#allocation3], 1
    %12 = vsyncpa %s11, 0
    %13 = vsyncpa [#allocation6], 0
    %14 = vsyncpa [#allocation9], 0
    %15 = vsyncpa [#allocation4], 0
    %s16 = scalar_lea.sflag [#allocation4], 1
    %17 = vsyncpa %s16, 0
    loop: start=0, step=1, limit=4
    $region2: #{tpu_custom_call.1} parent=1 // loop_pre_header
      _
    $region3: #{tpu_custom_call.1} parent=1 // loop_header
      %s19 = sphi 0, %s23
      %p20 = scmp.ge.s32.totalorder %s19, 4
      %s29 = sphi 0, %s31
      %s32 = sphi 0, %s29
      %s33 = sphi 0, %s32
      %s49 = sphi 0, %s33
      %s53 = sphi 0, %s53
      %s55 = sphi 0, %s53
      %s56 = sphi 0, %s55
      %s70 = sphi 0, %s56
      %s74 = sphi 0, %s74
      %s76 = sphi 0, %s74
      %s77 = sphi 0, %s76
      %s91 = sphi 0, %s77
      %s95 = sphi 0, %s95
      %s97 = sphi 0, %s95
      %s98 = sphi 0, %s97
      %s112 = sphi 0, %s98
      %s116 = sphi 0, %s116
      %s118 = sphi 0, %s116
      %s119 = sphi 0, %s118
      %s133 = sphi 0, %s119
      %s139 = sphi 0, %s141
      %s142 = sphi 0, %s139
      %s143 = sphi 0, %s142
      %s159 = sphi 0, %s143
    $region4: #{tpu_custom_call.1} parent=1 // loop_header_branch
      %22 = sbr.rel (%p20) target = $region8
    $region5: #{tpu_custom_call.1} parent=1 // loop_body
      %s24 = ssub.s32 %s19, 1
      %s25 = ssub.s32 %s19, 2
      %s26 = sadd.s32 %s19, 1
      %s27 = ssub.s32 %s19, %s26
      %p28 = scmp.eq.s32.totalorder %s27, 0
      %s30 = sadd.s32 %s29, 1
      %s31 = scalar_select %p28, %s29, %s30
      %p34 = pneg %p28
      %p35 = scmp.eq.s32.totalorder %s19, 1
      %p36 = por %p34, %p35
      %p37 = scmp.ne.s32.totalorder %s29, %s32
      %p38 = scmp.eq.s32.totalorder %s19, 0
      %p39 = por %p37, %p38
      %p40 = scmp.ne.s32.totalorder %s29, %s32
      %p41 = scmp.eq.s32.totalorder %s24, 1
      %p42 = por %p40, %p41
      %p43 = scmp.ne.s32.totalorder %s32, %s33
      %p44 = scmp.eq.s32.totalorder %s24, 0
      %p45 = por %p43, %p44
      %p46 = scmp.ne.s32.totalorder %s32, %s33
      %p47 = scmp.eq.s32.totalorder %s25, 1
      %p48 = por %p46, %p47
      %p50 = scmp.ne.s32.totalorder %s33, %s49
      %p51 = scmp.eq.s32.totalorder %s25, 0
      %p52 = por %p50, %p51
      %s54 = sadd.s32 %s53, 1
      %p57 = scmp.eq.s32.totalorder %s19, 1
      %p58 = scmp.ne.s32.totalorder %s53, %s55
      %p59 = scmp.eq.s32.totalorder %s19, 0
      %p60 = por %p58, %p59
      %p61 = scmp.ne.s32.totalorder %s53, %s55
      %p62 = scmp.eq.s32.totalorder %s24, 1
      %p63 = por %p61, %p62
      %p64 = scmp.ne.s32.totalorder %s55, %s56
      %p65 = scmp.eq.s32.totalorder %s24, 0
      %p66 = por %p64, %p65
      %p67 = scmp.ne.s32.totalorder %s55, %s56
      %p68 = scmp.eq.s32.totalorder %s25, 1
      %p69 = por %p67, %p68
      %p71 = scmp.ne.s32.totalorder %s56, %s70
      %p72 = scmp.eq.s32.totalorder %s25, 0
      %p73 = por %p71, %p72
      %s75 = sadd.s32 %s74, 1
      %p78 = scmp.eq.s32.totalorder %s19, 1
      %p79 = scmp.ne.s32.totalorder %s74, %s76
      %p80 = scmp.eq.s32.totalorder %s19, 0
      %p81 = por %p79, %p80
      %p82 = scmp.ne.s32.totalorder %s74, %s76
      %p83 = scmp.eq.s32.totalorder %s24, 1
      %p84 = por %p82, %p83
      %p85 = scmp.ne.s32.totalorder %s76, %s77
      %p86 = scmp.eq.s32.totalorder %s24, 0
      %p87 = por %p85, %p86
      %p88 = scmp.ne.s32.totalorder %s76, %s77
      %p89 = scmp.eq.s32.totalorder %s25, 1
      %p90 = por %p88, %p89
      %p92 = scmp.ne.s32.totalorder %s77, %s91
      %p93 = scmp.eq.s32.totalorder %s25, 0
      %p94 = por %p92, %p93
      %s96 = sadd.s32 %s95, 1
      %p99 = scmp.eq.s32.totalorder %s19, 1
      %p100 = scmp.ne.s32.totalorder %s95, %s97
      %p101 = scmp.eq.s32.totalorder %s19, 0
      %p102 = por %p100, %p101
      %p103 = scmp.ne.s32.totalorder %s95, %s97
      %p104 = scmp.eq.s32.totalorder %s24, 1
      %p105 = por %p103, %p104
      %p106 = scmp.ne.s32.totalorder %s97, %s98
      %p107 = scmp.eq.s32.totalorder %s24, 0
      %p108 = por %p106, %p107
      %p109 = scmp.ne.s32.totalorder %s97, %s98
      %p110 = scmp.eq.s32.totalorder %s25, 1
      %p111 = por %p109, %p110
      %p113 = scmp.ne.s32.totalorder %s98, %s112
      %p114 = scmp.eq.s32.totalorder %s25, 0
      %p115 = por %p113, %p114
      %s117 = sadd.s32 %s116, 1
      %p120 = scmp.eq.s32.totalorder %s19, 1
      %p121 = scmp.ne.s32.totalorder %s116, %s118
      %p122 = scmp.eq.s32.totalorder %s19, 0
      %p123 = por %p121, %p122
      %p124 = scmp.ne.s32.totalorder %s116, %s118
      %p125 = scmp.eq.s32.totalorder %s24, 1
      %p126 = por %p124, %p125
      %p127 = scmp.ne.s32.totalorder %s118, %s119
      %p128 = scmp.eq.s32.totalorder %s24, 0
      %p129 = por %p127, %p128
      %p130 = scmp.ne.s32.totalorder %s118, %s119
      %p131 = scmp.eq.s32.totalorder %s25, 1
      %p132 = por %p130, %p131
      %p134 = scmp.ne.s32.totalorder %s119, %s133
      %p135 = scmp.eq.s32.totalorder %s25, 0
      %p136 = por %p134, %p135
      %s137 = ssub.s32 %s19, %s26
      %p138 = scmp.eq.s32.totalorder %s137, 0
      %s140 = sadd.s32 %s139, 1
      %s141 = scalar_select %p138, %s139, %s140
      %p144 = pneg %p138
      %p145 = scmp.eq.s32.totalorder %s19, 1
      %p146 = por %p144, %p145
      %p147 = scmp.ne.s32.totalorder %s139, %s142
      %p148 = scmp.eq.s32.totalorder %s19, 0
      %p149 = por %p147, %p148
      %p150 = scmp.ne.s32.totalorder %s139, %s142
      %p151 = scmp.eq.s32.totalorder %s24, 1
      %p152 = por %p150, %p151
      %p153 = scmp.ne.s32.totalorder %s142, %s143
      %p154 = scmp.eq.s32.totalorder %s24, 0
      %p155 = por %p153, %p154
      %p156 = scmp.ne.s32.totalorder %s142, %s143
      %p157 = scmp.eq.s32.totalorder %s25, 1
      %p158 = por %p156, %p157
      %p160 = scmp.ne.s32.totalorder %s143, %s159
      %p161 = scmp.eq.s32.totalorder %s25, 0
      %p162 = por %p160, %p161
      %p163 = scmp.le.s32.totalorder 1, %s19
      %p164 = scmp.lt.s32.totalorder %s19, 3
      %p165 = pnand %p163, %p164
      %p166 = pneg %p165
      // Predicated region
      $region9: #{tpu_custom_call.1} parent=5 // pred_check
        _
      $region10: #{tpu_custom_call.1} parent=5 // pred_check_branch
        %168 = sbr.rel (%p165) target = $region12
      $region11: #{tpu_custom_call.1} parent=5 // pred_region
        %s169 = ssub.s32 %s19, 1
        // Predicated region
        $region13: #{tpu_custom_call.1} parent=11 // pred_check
          %p170 = pneg %p66
        $region14: #{tpu_custom_call.1} parent=11 // pred_check_branch
          %172 = sbr.rel (%p170) target = $region16
        $region15: #{tpu_custom_call.1} parent=11 // pred_region
          %s174 = ssub.s32 16, 16
          %175 = vsyncadd [#allocation6], %s174
          %s177 = sshll.u32 [#allocation5], 4
          %s178 = int_to_ptr.vmem [resolvable:$true] %s177
          %180 = dma.hbm_to_vmem [thread:$0]  %s1, 16, %s178, [#allocation6]
        $region16: #{tpu_custom_call.1} parent=11 // pred_fallthru
          _
        // Predicated region
        $region17: #{tpu_custom_call.1} parent=11 // pred_check
          %p181 = pneg %p87
        $region18: #{tpu_custom_call.1} parent=11 // pred_check_branch
          %183 = sbr.rel (%p181) target = $region20
        $region19: #{tpu_custom_call.1} parent=11 // pred_region
          %s185 = ssub.s32 64, 64
          %186 = vsyncadd [#allocation6], %s185
          %s188 = sshll.u32 [#allocation7], 4
          %s189 = int_to_ptr.vmem [resolvable:$true] %s188
          %191 = dma.hbm_to_vmem [thread:$0]  %s2, 64, %s189, [#allocation6]
        $region20: #{tpu_custom_call.1} parent=11 // pred_fallthru
          _
        // Predicated region
        $region21: #{tpu_custom_call.1} parent=11 // pred_check
          %p192 = pneg %p108
        $region22: #{tpu_custom_call.1} parent=11 // pred_check_branch
          %194 = sbr.rel (%p192) target = $region24
        $region23: #{tpu_custom_call.1} parent=11 // pred_region
          %s196 = ssub.s32 64, 64
          %197 = vsyncadd [#allocation9], %s196
          %s199 = sshll.u32 [#allocation8], 4
          %s200 = int_to_ptr.vmem [resolvable:$true] %s199
          %202 = dma.hbm_to_vmem [thread:$0]  %s3, 64, %s200, [#allocation9]
        $region24: #{tpu_custom_call.1} parent=11 // pred_fallthru
          _
        // Predicated region
        $region25: #{tpu_custom_call.1} parent=11 // pred_check
          %p203 = pneg %p129
        $region26: #{tpu_custom_call.1} parent=11 // pred_check_branch
          %205 = sbr.rel (%p203) target = $region28
        $region27: #{tpu_custom_call.1} parent=11 // pred_region
          %s207 = ssub.s32 128, 128
          %208 = vsyncadd [#allocation9], %s207
          %s210 = sshll.u32 [#allocation10], 4
          %s211 = int_to_ptr.vmem [resolvable:$true] %s210
          %213 = dma.hbm_to_vmem [thread:$0]  %s4, 128, %s211, [#allocation9]
        $region28: #{tpu_custom_call.1} parent=11 // pred_fallthru
          _
      $region12: #{tpu_custom_call.1} parent=5 // pred_fallthru
        _
      %p214 = scmp.lt.s32.totalorder %s19, 2
      // Predicated region
      $region29: #{tpu_custom_call.1} parent=5 // pred_check
        %p215 = pneg %p214
      $region30: #{tpu_custom_call.1} parent=5 // pred_check_branch
        %217 = sbr.rel (%p215) target = $region32
      $region31: #{tpu_custom_call.1} parent=5 // pred_region
        // Predicated region
        $region33: #{tpu_custom_call.1} parent=31 // pred_check
          %p218 = pneg %p39
        $region34: #{tpu_custom_call.1} parent=31 // pred_check_branch
          %220 = sbr.rel (%p218) target = $region36
        $region35: #{tpu_custom_call.1} parent=31 // pred_region
          %s221 = sand.u32 %s29, 1
          %s222 = scalar_lea.sflag [#allocation3], %s221
          %s223 = sand.u32 %s29, 1
          %s224 = smul.addr %s223, 4
          %s225 = scalar_lea.vmem [#allocation2], %s224
          %s227 = ssub.s32 64, 64
          %228 = vsyncadd %s222, %s227
          %s229 = smul.addr %s19, 64
          %s230 = scalar_lea.hbm %s0, %s229
          %s232 = sshll.u32 %s225, 4
          %s233 = int_to_ptr.vmem [resolvable:$true] %s232
          %235 = dma.hbm_to_vmem [thread:$0]  %s230, 64, %s233, %s222
        $region36: #{tpu_custom_call.1} parent=31 // pred_fallthru
          _
      $region32: #{tpu_custom_call.1} parent=5 // pred_fallthru
        _
      %p236 = scmp.le.s32.totalorder 1, %s19
      %p237 = scmp.lt.s32.totalorder %s19, 3
      %p238 = pnand %p236, %p237
      %p239 = pneg %p238
      // Predicated region
      $region37: #{tpu_custom_call.1} parent=5 // pred_check
        _
      $region38: #{tpu_custom_call.1} parent=5 // pred_check_branch
        %241 = sbr.rel (%p238) target = $region40
      $region39: #{tpu_custom_call.1} parent=5 // pred_region
        %s242 = ssub.s32 %s19, 1
        %s243 = sand.u32 %s32, 1
        %s244 = scalar_lea.sflag [#allocation3], %s243
        %s245 = sand.u32 %s32, 1
        %s246 = smul.addr %s245, 4
        %s247 = scalar_lea.vmem [#allocation2], %s246
        // Predicated region
        $region41: #{tpu_custom_call.1} parent=39 // pred_check
          %p248 = pneg %p45
        $region42: #{tpu_custom_call.1} parent=39 // pred_check_branch
          %250 = sbr.rel (%p248) target = $region44
        $region43: #{tpu_custom_call.1} parent=39 // pred_region
          %251 = dma.done %s244, 64
        $region44: #{tpu_custom_call.1} parent=39 // pred_fallthru
          _
        // Predicated region
        $region45: #{tpu_custom_call.1} parent=39 // pred_check
          %p252 = pneg %p66
        $region46: #{tpu_custom_call.1} parent=39 // pred_check_branch
          %254 = sbr.rel (%p252) target = $region48
        $region47: #{tpu_custom_call.1} parent=39 // pred_region
          %255 = dma.done [#allocation6], 16
        $region48: #{tpu_custom_call.1} parent=39 // pred_fallthru
          _
        // Predicated region
        $region49: #{tpu_custom_call.1} parent=39 // pred_check
          %p256 = pneg %p87
        $region50: #{tpu_custom_call.1} parent=39 // pred_check_branch
          %258 = sbr.rel (%p256) target = $region52
        $region51: #{tpu_custom_call.1} parent=39 // pred_region
          %259 = dma.done [#allocation6], 64
        $region52: #{tpu_custom_call.1} parent=39 // pred_fallthru
          _
        // Predicated region
        $region53: #{tpu_custom_call.1} parent=39 // pred_check
          %p260 = pneg %p108
        $region54: #{tpu_custom_call.1} parent=39 // pred_check_branch
          %262 = sbr.rel (%p260) target = $region56
        $region55: #{tpu_custom_call.1} parent=39 // pred_region
          %263 = dma.done [#allocation9], 64
        $region56: #{tpu_custom_call.1} parent=39 // pred_fallthru
          _
        // Predicated region
        $region57: #{tpu_custom_call.1} parent=39 // pred_check
          %p264 = pneg %p129
        $region58: #{tpu_custom_call.1} parent=39 // pred_check_branch
          %266 = sbr.rel (%p264) target = $region60
        $region59: #{tpu_custom_call.1} parent=39 // pred_region
          %267 = dma.done [#allocation9], 128
        $region60: #{tpu_custom_call.1} parent=39 // pred_fallthru
          _
        %s268 = sand.u32 %s32, 1
        %s269 = scalar_lea.sflag [#allocation3], %s268
        %s270 = sand.u32 %s32, 1
        %s271 = smul.addr %s270, 4
        %s272 = scalar_lea.vmem [#allocation2], %s271
        %p273 = pneg %p45
        %p274 = pneg %p42
        %p275 = pneg %p66
        %p276 = pneg %p63
        %p277 = pneg %p87
        %p278 = pneg %p84
        %p279 = pneg %p108
        %p280 = pneg %p105
        %p281 = pneg %p129
        %p282 = pneg %p126
        %p283 = pneg %p155
        %p284 = pneg %p152
        %s285 = sand.u32 %s142, 1
        %s286 = scalar_lea.sflag [#allocation4], %s285
        %s287 = sand.u32 %s142, 1
        %s288 = smul.addr %s287, 16
        %s289 = scalar_lea.vmem [#allocation11], %s288
        %v291 = vld [vmem:[%s247] sm:$0xf]
        %v292 = vld [vmem:[#allocation7] sm:$0xf]
        %294 = vset.pattern.permute.xlu0 0
        %295 = vperm.xlu0 %294, %v292
        %v296 = vpop.permute.xlu0 %295
        %v298 = vmul.f32 %v291, %v296
        %v299 = vld [vmem:[#allocation8] sm:$0xf]
        %301 = vset.pattern.permute.xlu0 0
        %302 = vperm.xlu0 %301, %v299
        %v303 = vpop.permute.xlu0 %302
        %v305 = vadd.f32 %v298, %v303
        %v306 = vmax.f32 %v305, 0.0
        %v307 = vpack.c.bf16 %v306, %v306
        %vm308 = vcmask 1041408
        %v311 = vsel %vm308, %v307, 0
        %313 = vrot.lane.b32.xlu0 %v311, 8
        %v314 = vpop.permute.xlu0 %313
        %vm315 = vcmask 64512
        %v317 = vsel %vm315, 0, %v314
        %vm318 = vcmask 326656
        %v319 = vsel %vm318, %v317, 0
        %v321 = vrot.slane %v319, 4
        %322 = vrot.lane.b32.xlu0 %v321, 127
        %v323 = vpop.permute.xlu0 %322
        %324 = vrot.lane.b32.xlu0 %v319, 126
        %v325 = vpop.permute.xlu0 %324
        %326 = vrot.lane.b32.xlu0 %v321, 125
        %v327 = vpop.permute.xlu0 %326
        %328 = vrot.lane.b32.xlu0 %v319, 124
        %v329 = vpop.permute.xlu0 %328
        %330 = vrot.lane.b32.xlu0 %v321, 123
        %v331 = vpop.permute.xlu0 %330
        %332 = vrot.lane.b32.xlu0 %v319, 122
        %v333 = vpop.permute.xlu0 %332
        %334 = vrot.lane.b32.xlu0 %v321, 121
        %v335 = vpop.permute.xlu0 %334
        %336 = vrot.lane.b32.xlu0 %v319, 120
        %v337 = vpop.permute.xlu0 %336
        %338 = vrot.lane.b32.xlu0 %v321, 119
        %v339 = vpop.permute.xlu0 %338
        %340 = vrot.lane.b32.xlu0 %v319, 118
        %v341 = vpop.permute.xlu0 %340
        %342 = vrot.lane.b32.xlu0 %v321, 117
        %v343 = vpop.permute.xlu0 %342
        %344 = vrot.lane.b32.xlu0 %v319, 116
        %v345 = vpop.permute.xlu0 %344
        %346 = vrot.lane.b32.xlu0 %v321, 115
        %v347 = vpop.permute.xlu0 %346
        %348 = vrot.lane.b32.xlu0 %v319, 114
        %v349 = vpop.permute.xlu0 %348
        %350 = vrot.lane.b32.xlu0 %v321, 113
        %v351 = vpop.permute.xlu0 %350
        %vm352 = vcmask 1043456
        %v354 = vsel %vm352, %v319, %v323
        %v358 = vsel %vm352, %v325, %v327
        %v362 = vsel %vm352, %v329, %v331
        %v366 = vsel %vm352, %v333, %v335
        %v370 = vsel %vm352, %v337, %v339
        %v374 = vsel %vm352, %v341, %v343
        %v378 = vsel %vm352, %v345, %v347
        %v382 = vsel %vm352, %v349, %v351
        %384 = vrot.lane.b32.xlu0 %v319, 112
        %v385 = vpop.permute.xlu0 %384
        %v386 = vld [vmem:[#allocation10] sm:$0xff]
        %v388 = vunpack.c.l.b16 %v386
        %v389 = vunpack.c.h.b16 %v386
        %v390 = vpack.c.b16 %v388, %v388
        %v391 = vpack.c.b16 %v389, %v389
        %v394 = vsel %vm315, %v391, 0
        %v397 = vsel %vm352, %v385, 0
        %399 = vmatprep.subr.bf16.mxu0 0
        %400 = vmatpush1.bf16.msra.mxu0 %v354
        %401 = vmatprep.subr.bf16.mxu0 0
        %402 = vmatpush1.bf16.msra.mxu0 %v358
        %403 = vmatprep.subr.bf16.mxu0 0
        %404 = vmatpush1.bf16.msra.mxu0 %v362
        %405 = vmatprep.subr.bf16.mxu0 0
        %406 = vmatpush1.bf16.msra.mxu0 %v366
        %407 = vmatprep.subr.bf16.mxu0 0
        %408 = vmatpush1.bf16.msra.mxu0 %v370
        %409 = vmatprep.subr.bf16.mxu0 0
        %410 = vmatpush1.bf16.msra.mxu0 %v374
        %411 = vmatprep.subr.bf16.mxu0 0
        %412 = vmatpush1.bf16.msra.mxu0 %v378
        %413 = vmatprep.subr.bf16.mxu0 0
        %414 = vmatpush1.bf16.msra.mxu0 %v382
        %415 = vmatprep.subr.bf16.mxu0 0
        %416 = vmatpush1.bf16.msra.mxu0 %v397
        %417 = vmatprep.subr.bf16.mxu0 0
        %418 = vmatpush1.bf16.msra.mxu0 0
        %419 = vmatprep.subr.bf16.mxu0 0
        %420 = vmatpush1.bf16.msra.mxu0 0
        %421 = vmatprep.subr.bf16.mxu0 0
        %422 = vmatpush1.bf16.msra.mxu0 0
        %423 = vmatprep.subr.bf16.mxu0 0
        %424 = vmatpush1.bf16.msra.mxu0 0
        %425 = vmatprep.subr.bf16.mxu0 0
        %426 = vmatpush1.bf16.msra.mxu0 0
        %427 = vmatprep.subr.bf16.mxu0 0
        %428 = vmatpush1.bf16.msra.mxu0 0
        %429 = vmatprep.subr.bf16.mxu0 0
        %430 = vmatpush1.bf16.msra.mxu0 0
        %431 = vmatprep.mubr.bf16.mxu0 %v394
        %432 = vmatmul.mubr.bf16.gmra.mrb[0].mxu0 %v390
        %v433 = vpop.f32.mrb[0].mxu0
        %v434 = vadd.f32 0.0, %v433
        %v435 = vpop.f32.mrb[0].mxu0
        %v436 = vpop.f32.mrb[0].mxu0
        %v437 = vpop.f32.mrb[0].mxu0
        %438 = vdwg.mxu0
        %v440 = vrot.slane %v434, 4
        %v442 = vsel %vm352, %v291, %v440
        %vm443 = vcmask 261120
        %444 = vst.msk [vmem:[%s289] sm:$0xff] %vm443, %v442
        %vm445 = vcmask 257024
        %446 = vst.msk [vmem:[%s289 + $0x8] sm:$0xf] %vm445, %v440
        %s447 = sand.u32 %s142, 1
        %s448 = scalar_lea.sflag [#allocation4], %s447
        %s449 = sand.u32 %s142, 1
        %s450 = smul.addr %s449, 16
        %s451 = scalar_lea.vmem [#allocation11], %s450
        // Predicated region
        $region61: #{tpu_custom_call.1} parent=39 // pred_check
          %p452 = pneg %p152
        $region62: #{tpu_custom_call.1} parent=39 // pred_check_branch
          %454 = sbr.rel (%p452) target = $region64
        $region63: #{tpu_custom_call.1} parent=39 // pred_region
          %s456 = ssub.s32 256, 256
          %457 = vsyncadd %s448, %s456
          %s458 = smul.addr %s24, 2
          %s459 = smul.addr %s458, 128
          %s460 = scalar_lea.hbm %s5, %s459
          %s461 = sshll.u32 %s451, 4
          %s462 = int_to_ptr.vmem [resolvable:$true] %s461
          %467 = dma.vmem_to_hbm [thread:$0]  %s462, 256, %s460, %s448, 128, 128, 8
        $region64: #{tpu_custom_call.1} parent=39 // pred_fallthru
          _
      $region40: #{tpu_custom_call.1} parent=5 // pred_fallthru
        _
      %p468 = scmp.le.s32.totalorder 2, %s19
      // Predicated region
      $region65: #{tpu_custom_call.1} parent=5 // pred_check
        %p469 = pneg %p468
      $region66: #{tpu_custom_call.1} parent=5 // pred_check_branch
        %471 = sbr.rel (%p469) target = $region68
      $region67: #{tpu_custom_call.1} parent=5 // pred_region
        %s472 = ssub.s32 %s19, 2
        // Predicated region
        $region69: #{tpu_custom_call.1} parent=67 // pred_check
          %p473 = pneg %p158
        $region70: #{tpu_custom_call.1} parent=67 // pred_check_branch
          %475 = sbr.rel (%p473) target = $region72
        $region71: #{tpu_custom_call.1} parent=67 // pred_region
          %s476 = sand.u32 %s143, 1
          %s477 = scalar_lea.sflag [#allocation4], %s476
          %s478 = sand.u32 %s143, 1
          %s479 = smul.addr %s478, 16
          %s480 = scalar_lea.vmem [#allocation11], %s479
          %481 = dma.done %s477, 256
        $region72: #{tpu_custom_call.1} parent=67 // pred_fallthru
          _
      $region68: #{tpu_custom_call.1} parent=5 // pred_fallthru
        _
    $region6: #{tpu_custom_call.1} parent=1 // loop_footer
      %s23 = sadd.s32 1, %s19
    $region7: #{tpu_custom_call.1} parent=1 // loop_footer_branch
      %18 = sbr.rel target = $region3
    $region8: #{tpu_custom_call.1} parent=1 // loop_exit
      _
    %482 = vsyncpa [#allocation3], 1
    %s483 = scalar_lea.sflag [#allocation3], 1
    %484 = vsyncpa %s483, 1
    %485 = vsyncpa [#allocation6], 1
    %486 = vsyncpa [#allocation9], 1
    %487 = vsyncpa [#allocation4], 1
    %s488 = scalar_lea.sflag [#allocation4], 1
    %489 = vsyncpa %s488, 1

</llo_original>
